<compile_context>
chip_gen: v6e
topology: v6e:2x2x1
jax: 0.10.0
libtpu: 0.0.40
codegen_flags: <defaults>
</compile_context>

<pallas_src>
import jax
import jax.numpy as jnp
from jax.experimental import pallas as pl
from jax.experimental.pallas import tpu as pltpu


# ----------------------------------------------------------------------------
# Kernel 1: fused affine heads — one small MXU op for all batch rows.
#   out[:, :C] = gamma + 1   (the +1 is pre-folded into the bias)
#   out[:, C:] = beta
# ----------------------------------------------------------------------------
def film_heads_kernel(r_ref, w_ref, b_ref, o_ref):
    r = r_ref[...].astype(jnp.float32)                 # (B, D_in)
    w = w_ref[...].astype(jnp.float32)                 # (D_in, 2C)
    o_ref[...] = (jnp.dot(r, w, preferred_element_type=jnp.float32)
                  + b_ref[...].astype(jnp.float32))    # (B, 2C), kept in f32


# ----------------------------------------------------------------------------
# Kernel 2: streaming modulation — pure element-wise, HBM-bandwidth-bound.
# ----------------------------------------------------------------------------
def film_modulate_kernel(x_ref, scale_ref, shift_ref, o_ref):
    # x: (TR, TL); scale/shift: (TR, 1) f32 — lane-axis broadcast is a cheap
    # splat, no relayout in the hot loop.
    o_ref[...] = (x_ref[...] * scale_ref[...] + shift_ref[...]).astype(o_ref.dtype)


# ----------------------------------------------------------------------------
# Generation-aware VMEM budgeting.
# ----------------------------------------------------------------------------
def _vmem_limit_bytes():
    """Scoped-VMEM ceiling: ~3/4 of physical, capped at 96 MiB.
    v5e/v6e (128 MiB) -> 96 MiB; v7x (64 MiB) -> 48 MiB."""
    try:
        cap = int(pltpu.get_tpu_info().vmem_capacity_bytes)
    except Exception:
        cap = 64 * 1024 * 1024          # conservative (v7x) fallback
    return min((cap * 3) // 4, 96 * 1024 * 1024)


def _pick_tiles(R, L, itemsize, tile_budget_bytes):
    """Pick (TR, TL) so one tile is ~tile_budget_bytes, sublane/lane dense, and
    legal: each block dim is a multiple of (8, 128) or equals the full extent."""
    budget_elems = max(1, tile_budget_bytes // itemsize)

    # Case 1: at least 8 full-L rows fit in the budget -> tile rows only.
    if L <= budget_elems // 8:
        tl = L
        tr = ((budget_elems // L) // 8) * 8
        if tr >= R:
            tr = R                       # full extent — always legal
        return tr, tl

    # Case 2: L is huge -> thin sublane-dense row tile, tile the lane axis.
    tr = 8 if R >= 8 else R
    tl = ((budget_elems // max(tr, 1)) // 128) * 128
    tl = max(tl, 128)
    if tl >= L:
        tl = L
    return tr, tl


def film_pallas(x, r, w_beta_t, b_beta, w_gamma_t, b_gamma):
    """x: (B, C, L), r: (B, D_in), w_*_t: (D_in, C) (= torch weight.T), b_*: (1, C)."""
    B, C, L = x.shape
    D_in = r.shape[1]

    if D_in == 0:                        # mirrors the `input_dim == 0` passthrough
        return x

    # --- 1) fused affine heads (single MXU op, +1 folded into the bias) -------
    w_cat = jnp.concatenate([w_gamma_t, w_beta_t], axis=-1)        # (D_in, 2C)
    b_cat = jnp.concatenate([b_gamma + 1.0, b_beta], axis=-1)      # (1, 2C)

    heads = pl.pallas_call(
        film_heads_kernel,
        out_shape=jax.ShapeDtypeStruct((B, 2 * C), jnp.float32),
    )(r, w_cat, b_cat)

    R = B * C
    scale = heads[:, :C].reshape(R, 1)   # f32 (gamma + 1), per-(b,c) scalar
    shift = heads[:, C:].reshape(R, 1)   # f32 beta

    # --- 2) streaming modulation over (R, L) ----------------------------------
    x2 = x.reshape(R, L)                 # contiguous reshape — free
    itemsize = jnp.dtype(x.dtype).itemsize

    vmem_limit = _vmem_limit_bytes()
    tile_budget = max(512 * 1024, vmem_limit // 6)   # ~4 live streamed tiles + slack
    tr, tl = _pick_tiles(R, L, itemsize, tile_budget)
    n_r = pl.cdiv(R, tr)
    n_l = pl.cdiv(L, tl)

    out2 = pl.pallas_call(
        film_modulate_kernel,
        out_shape=jax.ShapeDtypeStruct((R, L), x.dtype),
        grid_spec=pltpu.PrefetchScalarGridSpec(
            num_scalar_prefetch=0,
            # Single flattened parallel axis -> balanced megacore split on v7x
            # even when B (or B*C) is tiny.
            grid=(n_r * n_l,),
            in_specs=[
                pl.BlockSpec((tr, tl), lambda i: (i // n_l, i % n_l)),   # x tile
                pl.BlockSpec((tr, 1), lambda i: (i // n_l, 0)),          # scale
                pl.BlockSpec((tr, 1), lambda i: (i // n_l, 0)),          # shift
            ],
            out_specs=pl.BlockSpec((tr, tl), lambda i: (i // n_l, i % n_l)),
        ),
        compiler_params=pltpu.CompilerParams(
            dimension_semantics=("parallel",),
            vmem_limit_bytes=int(vmem_limit),
        ),
        cost_estimate=pl.CostEstimate(
            flops=2 * R * L,
            transcendentals=0,
            bytes_accessed=int(2 * R * L * itemsize + 2 * R * 4),
        ),
    )(x2, scale, shift)

    return out2.reshape(B, C, L)


def film_reference(x, r, w_beta_t, b_beta, w_gamma_t, b_gamma):
    beta = r @ w_beta_t + b_beta         # (B, C)
    gamma = r @ w_gamma_t + b_gamma      # (B, C)
    return x * (gamma[:, :, None] + 1.0) + beta[:, :, None]


if __name__ == "__main__":
    B, C, L, D_in = 2, 4, 16, 8          # batch, channels (output_dim), seq len, input_dim

    key = jax.random.PRNGKey(0)
    kx, kr, kwb, kbb, kwg, kbg = jax.random.split(key, 6)

    x = jax.random.normal(kx, (B, C, L), dtype=jnp.float32)
    r = jax.random.normal(kr, (B, D_in), dtype=jnp.float32)

    # nn.Linear default init: U(-1/sqrt(D_in), 1/sqrt(D_in)); weights stored
    # pre-transposed to (D_in, C) so the heads kernel computes r @ W directly.
    bound = 1.0 / (D_in ** 0.5)
    w_beta_t = jax.random.uniform(kwb, (D_in, C), jnp.float32, -bound, bound)
    b_beta = jax.random.uniform(kbb, (1, C), jnp.float32, -bound, bound)
    w_gamma_t = jax.random.uniform(kwg, (D_in, C), jnp.float32, -bound, bound)
    b_gamma = jax.random.uniform(kbg, (1, C), jnp.float32, -bound, bound)

    out = film_pallas(x, r, w_beta_t, b_beta, w_gamma_t, b_gamma)
    out = jax.block_until_ready(out)

    ref = film_reference(x, r, w_beta_t, b_beta, w_gamma_t, b_gamma)
    assert out.shape == (B, C, L)
    assert jnp.allclose(out, ref, atol=1e-5, rtol=1e-5), "mismatch vs reference"

    print("KERNEL_OK")
</pallas_src>

<mosaic_0001>
module attributes {stable_mosaic.version = 11 : i64} {
  func.func @film_heads_kernel(%arg0: memref<2x8xf32, #tpu.memory_space<vmem>>, %arg1: memref<8x8xf32, #tpu.memory_space<vmem>>, %arg2: memref<1x8xf32, #tpu.memory_space<vmem>>, %arg3: memref<2x8xf32, #tpu.memory_space<vmem>>) attributes {dimension_semantics = [], scalar_prefetch = 0 : i64, scratch_operands = 0 : i64, tpu.core_type = #tpu.core_type<tc>} {
    %c0 = arith.constant 0 : index
    %c0_0 = arith.constant 0 : index
    %0 = vector.load %arg0[%c0, %c0_0] : memref<2x8xf32, #tpu.memory_space<vmem>>, vector<2x8xf32>
    %c0_1 = arith.constant 0 : index
    %c0_2 = arith.constant 0 : index
    %1 = vector.load %arg1[%c0_1, %c0_2] : memref<8x8xf32, #tpu.memory_space<vmem>>, vector<8x8xf32>
    %cst = arith.constant dense<0.000000e+00> : vector<2x8xf32>
    %2 = tpu.matmul %0, %1, %cst {dimension_numbers = #tpu.dot_dimension_numbers<[1], [0], [0], [1], [0, 0, 1, 1], [], []>} : vector<2x8xf32>, vector<8x8xf32>, vector<2x8xf32> -> vector<2x8xf32>
    %c0_3 = arith.constant 0 : index
    %c0_4 = arith.constant 0 : index
    %3 = vector.load %arg2[%c0_3, %c0_4] : memref<1x8xf32, #tpu.memory_space<vmem>>, vector<1x8xf32>
    %4 = vector.broadcast %3 : vector<1x8xf32> to vector<2x8xf32>
    %5 = arith.addf %2, %4 : vector<2x8xf32>
    %c0_5 = arith.constant 0 : index
    %c0_6 = arith.constant 0 : index
    %6 = vector.load %arg3[%c0_5, %c0_6] : memref<2x8xf32, #tpu.memory_space<vmem>>, vector<2x8xf32>
    tpu.vector_store %arg3[%c0_5, %c0_6], %5 {strides = array<i32>} : memref<2x8xf32, #tpu.memory_space<vmem>>, vector<2x8xf32>,
    return
  }
}

</mosaic_0001>

<llo_original>
// kernel: tpu_custom_call.1
$region0: #{tpu_custom_call.1}
  #allocation0 [shape = 'u32[]', space=smem, size = 0x4, offset = 0x4, fixed_abs, tag = 'smem constant byte address 0x4 - core index']
  #allocation1 [shape = 'u32[144,128]{1,0:T(1,128)}', space=vmem, size = 0x12000, scoped, tag = 'internal scratch']
  %s0 = inlined_call_operand.hbm [shape: f32[2,8], index: 0, kind: input, shape index: {}]
  %s1 = inlined_call_operand.hbm [shape: f32[8,8], index: 1, kind: input, shape index: {}]
  %s2 = inlined_call_operand.vmem [shape: f32[1,8], index: 2, kind: input, shape index: {}]
  %s3 = inlined_call_operand.hbm [shape: f32[2,8], index: 3, kind: output, shape index: {}]
  %s4 = sld [smem:[#allocation0]]
  $region30: #{tpu_custom_call.1} parent=0
    _
  %s6 = ssub.s32 1, %s4
  %s7 = scalar_select 0, %s6, %s4
  $region1: #{tpu_custom_call.1} parent=0
    #allocation2 [shape = 'u8[1024]{0}', space=vmem, size = 0x400, scoped, tag = 'input window, operand 0, single buffered']
    #allocation3 [shape = 's32[1]{0}', space=sflag, size = 0x4, scoped, tag = 'scoped memory for tpu_custom_call.1']
    #allocation4 [shape = 's32[1]{0}', space=sflag, size = 0x4, scoped, tag = 'scoped memory for tpu_custom_call.1']
    #allocation5 [shape = 'u8[4096]{0}', space=vmem, size = 0x1000, scoped, tag = 'input window, operand 1, single buffered']
    #allocation6 [shape = 's32[1]{0}', space=sflag, size = 0x4, scoped, tag = 'scoped memory for tpu_custom_call.1']
    #allocation7 [shape = 'u8[1024]{0}', space=vmem, size = 0x400, scoped, tag = 'output window, operand 0, single buffered']
    %8 = vsyncpa [#allocation3], 0
    %9 = vsyncpa [#allocation6], 0
    %10 = vsyncpa [#allocation4], 0
    // Predicated region
    $region2: #{tpu_custom_call.1} parent=1 // pred_check
      _
    $region3: #{tpu_custom_call.1} parent=1 // pred_check_branch
      %12 = sbr.rel (0) target = $region5
    $region4: #{tpu_custom_call.1} parent=1 // pred_region
      %s14 = ssub.s32 32, 32
      %15 = vsyncadd [#allocation3], %s14
      %s17 = sshll.u32 [#allocation2], 4
      %s18 = int_to_ptr.vmem [resolvable:$true] %s17
      %20 = dma.hbm_to_vmem [thread:$0]  %s0, 32, %s18, [#allocation3]
    $region5: #{tpu_custom_call.1} parent=1 // pred_fallthru
      _
    // Predicated region
    $region6: #{tpu_custom_call.1} parent=1 // pred_check
      _
    $region7: #{tpu_custom_call.1} parent=1 // pred_check_branch
      %22 = sbr.rel (0) target = $region9
    $region8: #{tpu_custom_call.1} parent=1 // pred_region
      %s24 = ssub.s32 128, 128
      %25 = vsyncadd [#allocation6], %s24
      %s27 = sshll.u32 [#allocation5], 4
      %s28 = int_to_ptr.vmem [resolvable:$true] %s27
      %30 = dma.hbm_to_vmem [thread:$0]  %s1, 128, %s28, [#allocation6]
    $region9: #{tpu_custom_call.1} parent=1 // pred_fallthru
      _
    // Predicated region
    $region10: #{tpu_custom_call.1} parent=1 // pred_check
      _
    $region11: #{tpu_custom_call.1} parent=1 // pred_check_branch
      %32 = sbr.rel (0) target = $region13
    $region12: #{tpu_custom_call.1} parent=1 // pred_region
      _
    $region13: #{tpu_custom_call.1} parent=1 // pred_fallthru
      _
    // Predicated region
    $region14: #{tpu_custom_call.1} parent=1 // pred_check
      _
    $region15: #{tpu_custom_call.1} parent=1 // pred_check_branch
      %34 = sbr.rel (0) target = $region17
    $region16: #{tpu_custom_call.1} parent=1 // pred_region
      %35 = dma.done [#allocation3], 32
    $region17: #{tpu_custom_call.1} parent=1 // pred_fallthru
      _
    // Predicated region
    $region18: #{tpu_custom_call.1} parent=1 // pred_check
      _
    $region19: #{tpu_custom_call.1} parent=1 // pred_check_branch
      %37 = sbr.rel (0) target = $region21
    $region20: #{tpu_custom_call.1} parent=1 // pred_region
      %38 = dma.done [#allocation6], 128
    $region21: #{tpu_custom_call.1} parent=1 // pred_fallthru
      _
    %v39 = vld [vmem:[#allocation2] sm:$0x3]
    %v40 = vld [vmem:[#allocation5] sm:$0xff]
    %v41 = vld [vmem:[%s2] sm:$0x1]
    %v43 = vlaneseq
    %v44 = vshrl.u32 %v43, 7
    %v45 = vsub.s32 0, %v44
    %v46 = vrot.slane %v41, %v45
    %vm48 = vcmask 64512
    %v50 = vsel %vm48, %v39, 0
    %52 = vmatprep.subr.mxu0 0.0
    %53 = vmatpush1.msra.mxu0 0.0
    %54 = vmatprep.subr.mxu0 0.0
    %55 = vmatpush1.msra.mxu0 0.0
    %56 = vmatprep.subr.mxu0 0.0
    %57 = vmatpush1.msra.mxu0 0.0
    %58 = vmatprep.subr.mxu0 0.0
    %59 = vmatpush1.msra.mxu0 0.0
    %60 = vmatprep.subr.mxu0 0.0
    %61 = vmatpush1.msra.mxu0 0.0
    %62 = vmatprep.subr.mxu0 0.0
    %63 = vmatpush1.msra.mxu0 0.0
    %64 = vmatprep.subr.mxu0 0.0
    %65 = vmatpush1.msra.mxu0 0.0
    %66 = vmatprep.subr.mxu0 0.0
    %67 = vmatpush1.msra.mxu0 0.0
    %68 = vmatprep.subr.mxu0 0.0
    %69 = vmatpush1.msra.mxu0 0.0
    %70 = vmatprep.subr.mxu0 0.0
    %71 = vmatpush1.msra.mxu0 0.0
    %72 = vmatprep.subr.mxu0 0.0
    %73 = vmatpush1.msra.mxu0 0.0
    %74 = vmatprep.subr.mxu0 0.0
    %75 = vmatpush1.msra.mxu0 0.0
    %76 = vmatprep.subr.mxu0 0.0
    %77 = vmatpush1.msra.mxu0 0.0
    %78 = vmatprep.subr.mxu0 0.0
    %79 = vmatpush1.msra.mxu0 0.0
    %80 = vmatprep.subr.mxu0 0.0
    %81 = vmatpush1.msra.mxu0 0.0
    %82 = vmatprep.subr.mxu0 0.0
    %83 = vmatpush1.msra.mxu0 %v40
    %84 = vmatprep.subr.mxu0 0.0
    %85 = vmatpush2.msra.mxu0 0.0
    %86 = vmatprep.subr.mxu0 0.0
    %87 = vmatpush2.msra.mxu0 0.0
    %88 = vmatprep.subr.mxu0 0.0
    %89 = vmatpush2.msra.mxu0 0.0
    %90 = vmatprep.subr.mxu0 0.0
    %91 = vmatpush2.msra.mxu0 0.0
    %92 = vmatprep.subr.mxu0 0.0
    %93 = vmatpush2.msra.mxu0 0.0
    %94 = vmatprep.subr.mxu0 0.0
    %95 = vmatpush2.msra.mxu0 0.0
    %96 = vmatprep.subr.mxu0 0.0
    %97 = vmatpush2.msra.mxu0 0.0
    %98 = vmatprep.subr.mxu0 0.0
    %99 = vmatpush2.msra.mxu0 0.0
    %100 = vmatprep.subr.mxu0 0.0
    %101 = vmatpush2.msra.mxu0 0.0
    %102 = vmatprep.subr.mxu0 0.0
    %103 = vmatpush2.msra.mxu0 0.0
    %104 = vmatprep.subr.mxu0 0.0
    %105 = vmatpush2.msra.mxu0 0.0
    %106 = vmatprep.subr.mxu0 0.0
    %107 = vmatpush2.msra.mxu0 0.0
    %108 = vmatprep.subr.mxu0 0.0
    %109 = vmatpush2.msra.mxu0 0.0
    %110 = vmatprep.subr.mxu0 0.0
    %111 = vmatpush2.msra.mxu0 0.0
    %112 = vmatprep.subr.mxu0 0.0
    %113 = vmatpush2.msra.mxu0 0.0
    %114 = vmatprep.subr.mxu0 0.0
    %115 = vmatpush2.msra.mxu0 0.0
    %116 = vmatprep.mubr.f32.mxu0 0.0
    %117 = vmatmul.mubr.f32.gmra.mxu0 %v50
    %v118 = vpop.f32.mrf.mxu0
    %v119 = vadd.f32 %v46, %v118
    %v120 = vpop.f32.mrf.mxu0
    %121 = vdwg.mxu0
    %vm122 = vcmask 58368
    %123 = vst.msk [vmem:[#allocation7] sm:$0x3] %vm122, %v119
    // Predicated region
    $region22: #{tpu_custom_call.1} parent=1 // pred_check
      _
    $region23: #{tpu_custom_call.1} parent=1 // pred_check_branch
      %125 = sbr.rel (0) target = $region25
    $region24: #{tpu_custom_call.1} parent=1 // pred_region
      %s127 = ssub.s32 32, 32
      %128 = vsyncadd [#allocation4], %s127
      %s130 = sshll.u32 [#allocation7], 4
      %s131 = int_to_ptr.vmem [resolvable:$true] %s130
      %133 = dma.vmem_to_hbm [thread:$0]  %s131, 32, %s3, [#allocation4]
    $region25: #{tpu_custom_call.1} parent=1 // pred_fallthru
      _
    // Predicated region
    $region26: #{tpu_custom_call.1} parent=1 // pred_check
      _
    $region27: #{tpu_custom_call.1} parent=1 // pred_check_branch
      %135 = sbr.rel (0) target = $region29
    $region28: #{tpu_custom_call.1} parent=1 // pred_region
      %136 = dma.done [#allocation4], 32
    $region29: #{tpu_custom_call.1} parent=1 // pred_fallthru
      _
    %137 = vsyncpa [#allocation3], 1
    %138 = vsyncpa [#allocation6], 1
    %139 = vsyncpa [#allocation4], 1

</llo_original>
